<compile_context>
chip_gen: v6e
topology: v6e:2x2x1
jax: 0.10.0
libtpu: 0.0.40
codegen_flags: <defaults>
</compile_context>

<pallas_src>
import functools

import jax
import jax.numpy as jnp
from jax.experimental import pallas as pl
from jax.experimental.pallas import tpu as pltpu


def _vmem_limit_bytes():
    """Generation-aware VMEM limit (~75% of physical per-core VMEM)."""
    try:
        cap = pltpu.get_tpu_info().vmem_capacity_bytes
    except Exception:
        cap = 64 * 1024 * 1024
    return int(cap) * 3 // 4


def _largest_divisor_leq(n, cap):
    cap = max(1, min(int(n), int(cap)))
    for d in range(cap, 0, -1):
        if n % d == 0:
            return d
    return 1


def _pick_l_tile(L):
    """Lane tile for phase 2: full L unless L is a large multiple of 128."""
    if L % 128 != 0 or L <= 2048:
        return L
    t = 2048
    while t >= 128:
        if L % t == 0:
            return t
        t -= 128
    return L


def _conv_stats_kernel(x_ref, w_ref, conv_ref, stats_ref, slab_ref, *,
                       dilation, pad, l_out):
    """Dilated conv + partial BatchNorm statistics for one block of batch elems.

    x_ref:    (B, C_in, L)        f32  unpadded NCL input block
    w_ref:    (C_out, K*C_in)     bf16 taps stacked along the contraction dim
    conv_ref: (B, C_out, L)       bf16 chomped conv output
    stats_ref:(1, C_out, 2)       f32  partial [sum, sumsq] over B * l_out cols
    slab_ref: (K*C_in, B*l_out)   f32  scratch im2col slab (zero halo)
    """
    B, C_in, L = x_ref.shape
    C_out = w_ref.shape[0]
    K = w_ref.shape[1] // C_in

    # Zero the slab so the halo columns (left pad + chomped-tail right pad)
    # stay zero, then copy the valid input windows in at static offsets.
    slab_ref[...] = jnp.zeros_like(slab_ref)
    for b in range(B):
        xb = x_ref[b]                                        # (C_in, L) f32
        col0 = b * l_out
        for k in range(K):
            src = max(0, k * dilation - pad)                 # first valid input col
            dst = max(0, pad - k * dilation)                 # its position in window
            n_valid = L - src
            slab_ref[k * C_in:(k + 1) * C_in,
                     col0 + dst:col0 + dst + n_valid] = xb[:, src:src + n_valid]

    # One K*C_in-deep bf16 MXU matmul over all B*l_out lanes, fp32 accumulate.
    slab = slab_ref[...].astype(jnp.bfloat16)
    acc = jnp.dot(w_ref[...], slab,
                  preferred_element_type=jnp.float32)        # (C_out, B*l_out)

    # BatchNorm statistics cover the full pre-chomp length l_out per element.
    # TODO(synk): for very long N*L a shifted/Welford combine would be more
    # robust than fp32 sum/sum-of-squares.
    s = jnp.sum(acc, axis=1, keepdims=True)                  # (C_out, 1)
    sq = jnp.sum(acc * acc, axis=1, keepdims=True)           # (C_out, 1)
    stats_ref[0] = jnp.concatenate([s, sq], axis=1)          # (C_out, 2)

    # Chomped conv output: the last `pad` window columns never leave VMEM.
    for b in range(B):
        conv_ref[b] = acc[:, b * l_out:b * l_out + L].astype(conv_ref.dtype)


def _bn_relu_kernel(conv_ref, scale_ref, shift_ref, o_ref):
    """Fused BatchNorm affine + ReLU on one (B, C_out, L_tile) block."""
    y = conv_ref[...].astype(jnp.float32) * scale_ref[...] + shift_ref[...]
    o_ref[...] = jnp.maximum(y, 0.0).astype(o_ref.dtype)


@functools.partial(jax.jit, static_argnames=("dilation", "eps"))
def tcn_layer(x, weight, bias, gamma, beta, *, dilation=1, eps=1e-5):
    """Forward pass of TCNLayer (Conv1d -> BN(train) -> ReLU -> chomp).

    x:      (N, C_in, L)     float32, PyTorch NCL layout
    weight: (C_out, C_in, K) Conv1d weight
    bias:   (C_out,)         Conv1d bias -- cancels exactly under BatchNorm's
                             batch-mean subtraction, so not used in compute.
    gamma, beta: (C_out,)    BatchNorm1d affine parameters
    returns (N, C_out, L) float32.
    """
    del bias  # per-channel constant before batch-stat BatchNorm cancels exactly
    N, C_in, L = x.shape
    C_out, _, K = weight.shape
    pad = (K - 1) * dilation
    l_out = L + pad                      # pre-chomp conv length

    f32 = jnp.float32
    bf16 = jnp.bfloat16
    x = x.astype(f32)
    # (C_out, K*C_in): column k*C_in + i == channel i at tap k (matches slab).
    w2 = jnp.transpose(weight.astype(f32), (0, 2, 1)).reshape(
        C_out, K * C_in).astype(bf16)

    vmem_limit = _vmem_limit_bytes()

    # ---- Phase-1 tiling: several batch elements per step, halo in-kernel ----
    # TODO(synk): for very long sequences, additionally tile phase 1 over L
    # with a manual halo DMA instead of whole-L blocks.
    lane_target = 1024
    per_n_bytes = (2 * C_in * L * 4          # x block (double-buffered)
                   + 2 * C_out * L * 2       # conv out block (double-buffered)
                   + K * C_in * l_out * 4    # im2col scratch slab
                   + 2 * C_out * l_out * 4)  # acc + copies
    n_cap_vmem = max(1, (8 << 20) // max(per_n_bytes, 1))
    n_want = max(1, -(-lane_target // l_out))
    n_tile1 = _largest_divisor_leq(N, min(n_want, n_cap_vmem))
    grid1 = N // n_tile1

    conv, stats = pl.pallas_call(
        functools.partial(_conv_stats_kernel,
                          dilation=dilation, pad=pad, l_out=l_out),
        grid=(grid1,),
        in_specs=[
            pl.BlockSpec((n_tile1, C_in, L), lambda g: (g, 0, 0)),
            pl.BlockSpec((C_out, K * C_in), lambda g: (0, 0)),
        ],
        out_specs=[
            pl.BlockSpec((n_tile1, C_out, L), lambda g: (g, 0, 0)),
            pl.BlockSpec((1, C_out, 2), lambda g: (g, 0, 0)),
        ],
        out_shape=[
            jax.ShapeDtypeStruct((N, C_out, L), bf16),       # conv intermediate
            jax.ShapeDtypeStruct((grid1, C_out, 2), f32),    # packed sum/sumsq
        ],
        scratch_shapes=[pltpu.VMEM((K * C_in, n_tile1 * l_out), f32)],
        compiler_params=pltpu.CompilerParams(
            dimension_semantics=("parallel",),
            vmem_limit_bytes=vmem_limit),
    )(x, w2)

    # ---- Tiny host-side combine: fold stats into per-channel scale/shift ----
    count = float(N * l_out)
    s = jnp.sum(stats[:, :, 0], axis=0)                      # (C_out,)
    sq = jnp.sum(stats[:, :, 1], axis=0)
    mean = s / count
    var = jnp.maximum(sq / count - mean * mean, 0.0)         # biased batch var
    inv_std = jax.lax.rsqrt(var + eps)
    g = gamma.astype(f32)
    scale = (g * inv_std).reshape(C_out, 1)
    shift = (beta.astype(f32) - mean * g * inv_std).reshape(C_out, 1)

    # ---- Phase 2: fused BN affine + ReLU, chomped region only, lane-dense ----
    l_tile = _pick_l_tile(L)
    per_n2 = C_out * l_tile * (2 + 4) * 2    # bf16 in + f32 out, double-buffered
    n_tile2 = _largest_divisor_leq(N, max(1, (4 << 20) // max(per_n2, 1)))

    out = pl.pallas_call(
        _bn_relu_kernel,
        grid=(N // n_tile2, L // l_tile),
        in_specs=[
            pl.BlockSpec((n_tile2, C_out, l_tile), lambda i, j: (i, 0, j)),
            pl.BlockSpec((C_out, 1), lambda i, j: (0, 0)),
            pl.BlockSpec((C_out, 1), lambda i, j: (0, 0)),
        ],
        out_specs=pl.BlockSpec((n_tile2, C_out, l_tile), lambda i, j: (i, 0, j)),
        out_shape=jax.ShapeDtypeStruct((N, C_out, L), f32),
        compiler_params=pltpu.CompilerParams(
            dimension_semantics=("parallel", "parallel"),
            vmem_limit_bytes=vmem_limit),
    )(conv, scale, shift)
    return out


if __name__ == "__main__":
    # Small shapes consistent with the module's forward.
    N, C_in, C_out, L = 2, 4, 8, 16
    K, dilation = 3, 1

    key = jax.random.PRNGKey(0)
    kx, kw, kb = jax.random.split(key, 3)

    x = jax.random.normal(kx, (N, C_in, L), dtype=jnp.float32)
    bound = 1.0 / (C_in * K) ** 0.5
    weight = jax.random.uniform(kw, (C_out, C_in, K), jnp.float32, -bound, bound)
    bias = jax.random.uniform(kb, (C_out,), jnp.float32, -bound, bound)
    gamma = jnp.ones((C_out,), jnp.float32)   # BatchNorm1d default affine init
    beta = jnp.zeros((C_out,), jnp.float32)

    y = tcn_layer(x, weight, bias, gamma, beta, dilation=dilation)
    y = jax.block_until_ready(y)
    assert y.shape == (N, C_out, L), y.shape

    # Pure-JAX fp32 reference: Conv1d(+bias) -> BatchNorm1d(train) -> ReLU -> chomp.
    pad = (K - 1) * dilation
    conv_full = jax.lax.conv_general_dilated(
        x, weight, window_strides=(1,), padding=[(pad, pad)],
        rhs_dilation=(dilation,), dimension_numbers=("NCH", "OIH", "NCH"))
    conv_full = conv_full + bias[None, :, None]
    mu = jnp.mean(conv_full, axis=(0, 2), keepdims=True)
    vr = jnp.mean((conv_full - mu) ** 2, axis=(0, 2), keepdims=True)
    ref = jnp.maximum(
        (conv_full - mu) * jax.lax.rsqrt(vr + 1e-5) * gamma[None, :, None]
        + beta[None, :, None], 0.0)[:, :, :L]
    err = float(jnp.max(jnp.abs(y - ref)))
    # bf16 MXU inputs + bf16 conv intermediate (per perf review) -> loose tol.
    assert err < 5e-2, f"max abs error vs reference: {err}"

    print("KERNEL_OK")
</pallas_src>

<mosaic_0001>
module attributes {stable_mosaic.version = 11 : i64} {
  func.func @_conv_stats_kernel(%arg0: i32, %arg1: memref<2x4x16xf32, #tpu.memory_space<vmem>>, %arg2: memref<8x12xbf16, #tpu.memory_space<vmem>>, %arg3: memref<2x8x16xbf16, #tpu.memory_space<vmem>>, %arg4: memref<1x8x2xf32, #tpu.memory_space<vmem>>, %arg5: memref<12x36xf32, #tpu.memory_space<vmem>>) attributes {dimension_semantics = [#tpu.dimension_semantics<parallel>], iteration_bounds = array<i64: 1>, scalar_prefetch = 0 : i64, scratch_operands = 1 : i64, tpu.core_type = #tpu.core_type<tc>, window_params = [{transform_indices = @transform_0, window_bounds = array<i64: 2, 4, 16>}, {pipeline_mode = #tpu.pipeline_mode<synchronous>, transform_indices = @transform_1, window_bounds = array<i64: 8, 12>}, {transform_indices = @transform_2, window_bounds = array<i64: 2, 8, 16>}, {transform_indices = @transform_3, window_bounds = array<i64: 1, 8, 2>}]} {
    %cst = arith.constant 0.000000e+00 : f32
    %0 = vector.broadcast %cst : f32 to vector<12x36xf32>
    %c0 = arith.constant 0 : index
    %c0_0 = arith.constant 0 : index
    %1 = vector.load %arg5[%c0, %c0_0] : memref<12x36xf32, #tpu.memory_space<vmem>>, vector<12x36xf32>
    tpu.vector_store %arg5[%c0, %c0_0], %0 {strides = array<i32>} : memref<12x36xf32, #tpu.memory_space<vmem>>, vector<12x36xf32>,
    %c0_1 = arith.constant 0 : index
    %c0_2 = arith.constant 0 : index
    %c0_3 = arith.constant 0 : index
    %2 = vector.load %arg1[%c0_1, %c0_2, %c0_3] : memref<2x4x16xf32, #tpu.memory_space<vmem>>, vector<1x4x16xf32>
    %3 = vector.shape_cast %2 : vector<1x4x16xf32> to vector<4x16xf32>
    %c0_4 = arith.constant 0 : index
    %c2 = arith.constant 2 : index
    %4 = vector.load %arg5[%c0_4, %c2] : memref<12x36xf32, #tpu.memory_space<vmem>>, vector<4x16xf32>
    tpu.vector_store %arg5[%c0_4, %c2], %3 {strides = array<i32>} : memref<12x36xf32, #tpu.memory_space<vmem>>, vector<4x16xf32>,
    %c4 = arith.constant 4 : index
    %c1 = arith.constant 1 : index
    %5 = vector.load %arg5[%c4, %c1] : memref<12x36xf32, #tpu.memory_space<vmem>>, vector<4x16xf32>
    tpu.vector_store %arg5[%c4, %c1], %3 {strides = array<i32>} : memref<12x36xf32, #tpu.memory_space<vmem>>, vector<4x16xf32>,
    %c8 = arith.constant 8 : index
    %c0_5 = arith.constant 0 : index
    %6 = vector.load %arg5[%c8, %c0_5] : memref<12x36xf32, #tpu.memory_space<vmem>>, vector<4x16xf32>
    tpu.vector_store %arg5[%c8, %c0_5], %3 {strides = array<i32>} : memref<12x36xf32, #tpu.memory_space<vmem>>, vector<4x16xf32>,
    %c1_6 = arith.constant 1 : index
    %c0_7 = arith.constant 0 : index
    %c0_8 = arith.constant 0 : index
    %7 = vector.load %arg1[%c1_6, %c0_7, %c0_8] : memref<2x4x16xf32, #tpu.memory_space<vmem>>, vector<1x4x16xf32>
    %8 = vector.shape_cast %7 : vector<1x4x16xf32> to vector<4x16xf32>
    %c0_9 = arith.constant 0 : index
    %c20 = arith.constant 20 : index
    %9 = vector.load %arg5[%c0_9, %c20] : memref<12x36xf32, #tpu.memory_space<vmem>>, vector<4x16xf32>
    tpu.vector_store %arg5[%c0_9, %c20], %8 {strides = array<i32>} : memref<12x36xf32, #tpu.memory_space<vmem>>, vector<4x16xf32>,
    %c4_10 = arith.constant 4 : index
    %c19 = arith.constant 19 : index
    %10 = vector.load %arg5[%c4_10, %c19] : memref<12x36xf32, #tpu.memory_space<vmem>>, vector<4x16xf32>
    tpu.vector_store %arg5[%c4_10, %c19], %8 {strides = array<i32>} : memref<12x36xf32, #tpu.memory_space<vmem>>, vector<4x16xf32>,
    %c8_11 = arith.constant 8 : index
    %c18 = arith.constant 18 : index
    %11 = vector.load %arg5[%c8_11, %c18] : memref<12x36xf32, #tpu.memory_space<vmem>>, vector<4x16xf32>
    tpu.vector_store %arg5[%c8_11, %c18], %8 {strides = array<i32>} : memref<12x36xf32, #tpu.memory_space<vmem>>, vector<4x16xf32>,
    %c0_12 = arith.constant 0 : index
    %c0_13 = arith.constant 0 : index
    %12 = vector.load %arg5[%c0_12, %c0_13] : memref<12x36xf32, #tpu.memory_space<vmem>>, vector<12x36xf32>
    %13 = arith.truncf %12 : vector<12x36xf32> to vector<12x36xbf16>
    %c0_14 = arith.constant 0 : index
    %c0_15 = arith.constant 0 : index
    %14 = vector.load %arg2[%c0_14, %c0_15] : memref<8x12xbf16, #tpu.memory_space<vmem>>, vector<8x12xbf16>
    %cst_16 = arith.constant dense<0.000000e+00> : vector<8x36xf32>
    %15 = tpu.matmul %14, %13, %cst_16 {dimension_numbers = #tpu.dot_dimension_numbers<[1], [0], [0], [1], [0, 0, 1, 1], [], []>} : vector<8x12xbf16>, vector<12x36xbf16>, vector<8x36xf32> -> vector<8x36xf32>
    %cst_17 = arith.constant dense<0.000000e+00> : vector<8xf32>
    %16 = vector.multi_reduction <add>, %15, %cst_17 [1] : vector<8x36xf32> to vector<8xf32>
    %17 = vector.shape_cast %16 : vector<8xf32> to vector<8x1xf32>
    %18 = arith.mulf %15, %15 : vector<8x36xf32>
    %cst_18 = arith.constant dense<0.000000e+00> : vector<8xf32>
    %19 = vector.multi_reduction <add>, %18, %cst_18 [1] : vector<8x36xf32> to vector<8xf32>
    %20 = vector.shape_cast %19 : vector<8xf32> to vector<8x1xf32>
    %21 = tpu.concatenate %17, %20 in 1 : vector<8x1xf32>, vector<8x1xf32> -> vector<8x2xf32>
    %c0_19 = arith.constant 0 : index
    %c0_20 = arith.constant 0 : index
    %c0_21 = arith.constant 0 : index
    %22 = vector.load %arg4[%c0_19, %c0_20, %c0_21] : memref<1x8x2xf32, #tpu.memory_space<vmem>>, vector<1x8x2xf32>
    %23 = vector.shape_cast %22 : vector<1x8x2xf32> to vector<8x2xf32>
    %24 = vector.shape_cast %21 : vector<8x2xf32> to vector<1x8x2xf32>
    tpu.vector_store %arg4[%c0_19, %c0_20, %c0_21], %24 {strides = array<i32>} : memref<1x8x2xf32, #tpu.memory_space<vmem>>, vector<1x8x2xf32>,
    %25 = vector.extract_strided_slice %15 {offsets = [0, 0], sizes = [8, 16], strides = [1, 1]} : vector<8x36xf32> to vector<8x16xf32>
    %26 = arith.truncf %25 : vector<8x16xf32> to vector<8x16xbf16>
    %c0_22 = arith.constant 0 : index
    %c0_23 = arith.constant 0 : index
    %c0_24 = arith.constant 0 : index
    %27 = vector.load %arg3[%c0_22, %c0_23, %c0_24] : memref<2x8x16xbf16, #tpu.memory_space<vmem>>, vector<1x8x16xbf16>
    %28 = vector.shape_cast %27 : vector<1x8x16xbf16> to vector<8x16xbf16>
    %29 = vector.shape_cast %26 : vector<8x16xbf16> to vector<1x8x16xbf16>
    tpu.vector_store %arg3[%c0_22, %c0_23, %c0_24], %29 {strides = array<i32>} : memref<2x8x16xbf16, #tpu.memory_space<vmem>>, vector<1x8x16xbf16>,
    %30 = vector.extract_strided_slice %15 {offsets = [0, 18], sizes = [8, 16], strides = [1, 1]} : vector<8x36xf32> to vector<8x16xf32>
    %31 = arith.truncf %30 : vector<8x16xf32> to vector<8x16xbf16>
    %c1_25 = arith.constant 1 : index
    %c0_26 = arith.constant 0 : index
    %c0_27 = arith.constant 0 : index
    %32 = vector.load %arg3[%c1_25, %c0_26, %c0_27] : memref<2x8x16xbf16, #tpu.memory_space<vmem>>, vector<1x8x16xbf16>
    %33 = vector.shape_cast %32 : vector<1x8x16xbf16> to vector<8x16xbf16>
    %34 = vector.shape_cast %31 : vector<8x16xbf16> to vector<1x8x16xbf16>
    tpu.vector_store %arg3[%c1_25, %c0_26, %c0_27], %34 {strides = array<i32>} : memref<2x8x16xbf16, #tpu.memory_space<vmem>>, vector<1x8x16xbf16>,
    return
  }
  func.func @transform_0(%arg0: i32) -> (i32, i32, i32) {
    %c0_i32 = arith.constant 0 : i32
    %c0_i32_0 = arith.constant 0 : i32
    %c0_i32_1 = arith.constant 0 : i32
    return %arg0, %c0_i32, %c0_i32_0 : i32, i32, i32
  }
  func.func @transform_1(%arg0: i32) -> (i32, i32) {
    %c0_i32 = arith.constant 0 : i32
    %c0_i32_0 = arith.constant 0 : i32
    %c0_i32_1 = arith.constant 0 : i32
    return %c0_i32, %c0_i32_0 : i32, i32
  }
  func.func @transform_2(%arg0: i32) -> (i32, i32, i32) {
    %c0_i32 = arith.constant 0 : i32
    %c0_i32_0 = arith.constant 0 : i32
    %c0_i32_1 = arith.constant 0 : i32
    return %arg0, %c0_i32, %c0_i32_0 : i32, i32, i32
  }
  func.func @transform_3(%arg0: i32) -> (i32, i32, i32) {
    %c0_i32 = arith.constant 0 : i32
    %c0_i32_0 = arith.constant 0 : i32
    %c0_i32_1 = arith.constant 0 : i32
    return %arg0, %c0_i32, %c0_i32_0 : i32, i32, i32
  }
}

module attributes {stable_mosaic.version = 11 : i64} {
  func.func @_bn_relu_kernel(%arg0: i32, %arg1: i32, %arg2: memref<2x8x16xbf16, #tpu.memory_space<vmem>>, %arg3: memref<8x1xf32, #tpu.memory_space<vmem>>, %arg4: memref<8x1xf32, #tpu.memory_space<vmem>>, %arg5: memref<2x8x16xf32, #tpu.memory_space<vmem>>) attributes {dimension_semantics = [#tpu.dimension_semantics<parallel>, #tpu.dimension_semantics<parallel>], iteration_bounds = array<i64: 1, 1>, scalar_prefetch = 0 : i64, scratch_operands = 0 : i64, tpu.core_type = #tpu.core_type<tc>, window_params = [{transform_indices = @transform_0, window_bounds = array<i64: 2, 8, 16>}, {pipeline_mode = #tpu.pipeline_mode<synchronous>, transform_indices = @transform_1, window_bounds = array<i64: 8, 1>}, {pipeline_mode = #tpu.pipeline_mode<synchronous>, transform_indices = @transform_2, window_bounds = array<i64: 8, 1>}, {transform_indices = @transform_3, window_bounds = array<i64: 2, 8, 16>}]} {
    %c0 = arith.constant 0 : index
    %c0_0 = arith.constant 0 : index
    %c0_1 = arith.constant 0 : index
    %0 = vector.load %arg2[%c0, %c0_0, %c0_1] : memref<2x8x16xbf16, #tpu.memory_space<vmem>>, vector<2x8x16xbf16>
    %1 = arith.extf %0 : vector<2x8x16xbf16> to vector<2x8x16xf32>
    %c0_2 = arith.constant 0 : index
    %c0_3 = arith.constant 0 : index
    %2 = vector.load %arg3[%c0_2, %c0_3] : memref<8x1xf32, #tpu.memory_space<vmem>>, vector<8x1xf32>
    %3 = vector.shape_cast %2 : vector<8x1xf32> to vector<1x8x1xf32>
    %4 = vector.broadcast %3 : vector<1x8x1xf32> to vector<2x8x16xf32>
    %5 = arith.mulf %1, %4 : vector<2x8x16xf32>
    %c0_4 = arith.constant 0 : index
    %c0_5 = arith.constant 0 : index
    %6 = vector.load %arg4[%c0_4, %c0_5] : memref<8x1xf32, #tpu.memory_space<vmem>>, vector<8x1xf32>
    %7 = vector.shape_cast %6 : vector<8x1xf32> to vector<1x8x1xf32>
    %8 = vector.broadcast %7 : vector<1x8x1xf32> to vector<2x8x16xf32>
    %9 = arith.addf %5, %8 : vector<2x8x16xf32>
    %cst = arith.constant 0.000000e+00 : f32
    %10 = vector.broadcast %cst : f32 to vector<2x8x16xf32>
    %11 = arith.maximumf %9, %10 : vector<2x8x16xf32>
    %c0_6 = arith.constant 0 : index
    %c0_7 = arith.constant 0 : index
    %c0_8 = arith.constant 0 : index
    %12 = vector.load %arg5[%c0_6, %c0_7, %c0_8] : memref<2x8x16xf32, #tpu.memory_space<vmem>>, vector<2x8x16xf32>
    tpu.vector_store %arg5[%c0_6, %c0_7, %c0_8], %11 {strides = array<i32>} : memref<2x8x16xf32, #tpu.memory_space<vmem>>, vector<2x8x16xf32>,
    return
  }
  func.func @transform_0(%arg0: i32, %arg1: i32) -> (i32, i32, i32) {
    %c0_i32 = arith.constant 0 : i32
    %c0_i32_0 = arith.constant 0 : i32
    return %arg0, %c0_i32, %arg1 : i32, i32, i32
  }
  func.func @transform_1(%arg0: i32, %arg1: i32) -> (i32, i32) {
    %c0_i32 = arith.constant 0 : i32
    %c0_i32_0 = arith.constant 0 : i32
    %c0_i32_1 = arith.constant 0 : i32
    return %c0_i32, %c0_i32_0 : i32, i32
  }
  func.func @transform_2(%arg0: i32, %arg1: i32) -> (i32, i32) {
    %c0_i32 = arith.constant 0 : i32
    %c0_i32_0 = arith.constant 0 : i32
    %c0_i32_1 = arith.constant 0 : i32
    return %c0_i32, %c0_i32_0 : i32, i32
  }
  func.func @transform_3(%arg0: i32, %arg1: i32) -> (i32, i32, i32) {
    %c0_i32 = arith.constant 0 : i32
    %c0_i32_0 = arith.constant 0 : i32
    return %arg0, %c0_i32, %arg1 : i32, i32, i32
  }
}

</mosaic_0001>

<llo_original>
// kernel: tcn_layer.2
$region0: #{tcn_layer.2}
  #allocation0 [shape = 'u32[]', space=smem, size = 0x4, offset = 0x4, fixed_abs, tag = 'smem constant byte address 0x4 - core index']
  #allocation1 [shape = 'u32[144,128]{1,0:T(1,128)}', space=vmem, size = 0x12000, scoped, tag = 'internal scratch']
  #allocation2 [shape = 'f32[12,36]{1,0:T(8,128)}', space=vmem, size = 0x2000, scoped, tag = 'scratch operand']
  %s0 = inlined_call_operand.vmem [shape: f32[2,4,16], index: 0, kind: input, shape index: {}]
  %s1 = inlined_call_operand.vmem [shape: bf16[8,12], index: 1, kind: input, shape index: {}]
  %s2 = inlined_call_operand.vmem [shape: bf16[2,8,16], index: 2, kind: output, shape index: {0}]
  %s3 = inlined_call_operand.vmem [shape: f32[1,8,2], index: 3, kind: output, shape index: {1}]
  %4 = xla_tuple %s2, %s3
  %s5 = sld [smem:[#allocation0]]
  $region26: #{tcn_layer.2} parent=0
    _
  %s7 = ssub.s32 1, %s5
  %s8 = scalar_select 0, %s7, %s5
  // Predicated region
  $region2: #{tcn_layer.2} parent=0 // pred_check
    _
  $region3: #{tcn_layer.2} parent=0 // pred_check_branch
    %10 = sbr.rel (0) target = $region5
  $region4: #{tcn_layer.2} parent=0 // pred_region
    _
  $region5: #{tcn_layer.2} parent=0 // pred_fallthru
    _
  // Predicated region
  $region6: #{tcn_layer.2} parent=0 // pred_check
    _
  $region7: #{tcn_layer.2} parent=0 // pred_check_branch
    %12 = sbr.rel (0) target = $region9
  $region8: #{tcn_layer.2} parent=0 // pred_region
    _
  $region9: #{tcn_layer.2} parent=0 // pred_fallthru
    _
  %vm14 = vcmask 293888
  %15 = vst.msk [vmem:[#allocation2] sm:$0xff] %vm14, 0.0
  %vm16 = vcmask 289792
  %17 = vst.msk [vmem:[#allocation2 + $0x8] sm:$0xf] %vm16, 0.0
  %v18 = vld [vmem:[%s0] sm:$0xf]
  %20 = vrot.lane.b32.xlu0 %v18, 2
  %v21 = vpop.permute.xlu0 %20
  %vm23 = vcmask 142352
  %24 = vst.msk [vmem:[#allocation2] sm:$0xf] %vm23, %v21
  %25 = vrot.lane.b32.xlu0 %v18, 1
  %v26 = vpop.permute.xlu0 %25
  %vm28 = vcmask 134152
  %29 = vst.msk [vmem:[#allocation2 + $0x4] sm:$0xf] %vm28, %v26
  %vm30 = vcmask 125952
  %31 = vst.msk [vmem:[#allocation2 + $0x8] sm:$0xf] %vm30, %v18
  %s32 = scalar_lea.vmem %s0, 4
  %v33 = vld [vmem:[%s32] sm:$0xf]
  %35 = vrot.lane.b32.xlu0 %v33, 20
  %v36 = vpop.permute.xlu0 %35
  %vm38 = vcmask 289952
  %39 = vst.msk [vmem:[#allocation2] sm:$0xf] %vm38, %v36
  %40 = vrot.lane.b32.xlu0 %v33, 19
  %v41 = vpop.permute.xlu0 %40
  %vm43 = vcmask 281752
  %44 = vst.msk [vmem:[#allocation2 + $0x4] sm:$0xf] %vm43, %v41
  %45 = vrot.lane.b32.xlu0 %v33, 18
  %v46 = vpop.permute.xlu0 %45
  %vm48 = vcmask 273552
  %49 = vst.msk [vmem:[#allocation2 + $0x8] sm:$0xf] %vm48, %v46
  %v50 = vld [vmem:[#allocation2] sm:$0xff]
  %v51 = vld [vmem:[#allocation2 + $0x8] sm:$0xf]
  %v52 = vpack.c.bf16 %v51, %v50
  %v53 = vld [vmem:[%s1] sm:$0xf]
  %vm54 = vcmask 97280
  %v56 = vsel %vm54, %v53, 0
  %vm58 = vcmask 1045504
  %v60 = vsel %vm58, %v52, 0
  %62 = vmatprep.subr.bf16.mxu0 0
  %63 = vmatpush1.bf16.msra.mxu0 0
  %64 = vmatprep.subr.bf16.mxu0 0
  %65 = vmatpush1.bf16.msra.mxu0 0
  %66 = vmatprep.subr.bf16.mxu0 0
  %67 = vmatpush1.bf16.msra.mxu0 0
  %68 = vmatprep.subr.bf16.mxu0 0
  %69 = vmatpush1.bf16.msra.mxu0 0
  %70 = vmatprep.subr.bf16.mxu0 0
  %71 = vmatpush1.bf16.msra.mxu0 0
  %72 = vmatprep.subr.bf16.mxu0 0
  %73 = vmatpush1.bf16.msra.mxu0 0
  %74 = vmatprep.subr.bf16.mxu0 0
  %75 = vmatpush1.bf16.msra.mxu0 0
  %76 = vmatprep.subr.bf16.mxu0 0
  %77 = vmatpush1.bf16.msra.mxu0 %v60
  %78 = vmatprep.subr.bf16.mxu0 0
  %79 = vmatpush2.bf16.msra.mxu0 0
  %80 = vmatprep.subr.bf16.mxu0 0
  %81 = vmatpush2.bf16.msra.mxu0 0
  %82 = vmatprep.subr.bf16.mxu0 0
  %83 = vmatpush2.bf16.msra.mxu0 0
  %84 = vmatprep.subr.bf16.mxu0 0
  %85 = vmatpush2.bf16.msra.mxu0 0
  %86 = vmatprep.subr.bf16.mxu0 0
  %87 = vmatpush2.bf16.msra.mxu0 0
  %88 = vmatprep.subr.bf16.mxu0 0
  %89 = vmatpush2.bf16.msra.mxu0 0
  %90 = vmatprep.subr.bf16.mxu0 0
  %91 = vmatpush2.bf16.msra.mxu0 0
  %92 = vmatprep.subr.bf16.mxu0 0
  %93 = vmatpush2.bf16.msra.mxu0 0
  %94 = vmatprep.mubr.bf16.mxu0 0
  %95 = vmatmul.mubr.bf16.gmra.mxu0 %v56
  %v96 = vpop.f32.mrf.mxu0
  %v97 = vadd.f32 0.0, %v96
  %v98 = vpop.f32.mrf.mxu0
  %v99 = vpop.f32.mrf.mxu0
  %v100 = vpop.f32.mrf.mxu0
  %101 = vdwg.mxu0
  %v102 = vsel %vm14, %v97, 0.0
  %103 = vadd.xlane.f32.xlu0 %v102
  %v104 = vpop.xlane.xlu0 %103
  %v105 = vmul.f32 %v97, %v97
  %v106 = vsel %vm14, %v105, 0.0
  %107 = vadd.xlane.f32.xlu0 %v106
  %v108 = vpop.xlane.xlu0 %107
  %vm109 = vcmask 7168
  %v110 = vsel %vm109, %v104, %v108
  %vm111 = vcmask 15360
  %112 = vst.msk [vmem:[%s3] sm:$0xff] %vm111, %v110
  %v113 = vpack.c.bf16 %v97, %v97
  %114 = vst.msk [vmem:[%s2] sm:$0xf] %vm30, %v113
  %v116 = vunpack.c.l.b16 %v113
  %v117 = vpack.c.b16 %v116, %v116
  %118 = vrot.lane.b32.xlu0 %v117, 110
  %v119 = vpop.permute.xlu0 %118
  %s121 = scalar_lea.vmem %s2, 4
  %122 = vst.msk [vmem:[%s121] sm:$0xf] %vm30, %v119
  // Predicated region
  $region10: #{tcn_layer.2} parent=0 // pred_check
    _
  $region11: #{tcn_layer.2} parent=0 // pred_check_branch
    %124 = sbr.rel (0) target = $region13
  $region12: #{tcn_layer.2} parent=0 // pred_region
    _
  $region13: #{tcn_layer.2} parent=0 // pred_fallthru
    _
  // Predicated region
  $region14: #{tcn_layer.2} parent=0 // pred_check
    _
  $region15: #{tcn_layer.2} parent=0 // pred_check_branch
    %126 = sbr.rel (0) target = $region17
  $region16: #{tcn_layer.2} parent=0 // pred_region
    _
  $region17: #{tcn_layer.2} parent=0 // pred_fallthru
    _
  // Predicated region
  $region18: #{tcn_layer.2} parent=0 // pred_check
    _
  $region19: #{tcn_layer.2} parent=0 // pred_check_branch
    %128 = sbr.rel (0) target = $region21
  $region20: #{tcn_layer.2} parent=0 // pred_region
    _
  $region21: #{tcn_layer.2} parent=0 // pred_fallthru
    _
  // Predicated region
  $region22: #{tcn_layer.2} parent=0 // pred_check
    _
  $region23: #{tcn_layer.2} parent=0 // pred_check_branch
    %130 = sbr.rel (0) target = $region25
  $region24: #{tcn_layer.2} parent=0 // pred_region
    _
  $region25: #{tcn_layer.2} parent=0 // pred_fallthru
    _

// kernel: tcn_layer.3
$region0: #{tcn_layer.3}
  #allocation0 [shape = 'u32[]', space=smem, size = 0x4, offset = 0x4, fixed_abs, tag = 'smem constant byte address 0x4 - core index']
  #allocation1 [shape = 'u32[144,128]{1,0:T(1,128)}', space=vmem, size = 0x12000, scoped, tag = 'internal scratch']
  %s0 = inlined_call_operand.vmem [shape: bf16[2,8,16], index: 0, kind: input, shape index: {}]
  %s1 = inlined_call_operand.vmem [shape: f32[8,1], index: 1, kind: input, shape index: {}]
  %s2 = inlined_call_operand.vmem [shape: f32[8,1], index: 2, kind: input, shape index: {}]
  %s3 = inlined_call_operand.hbm [shape: f32[2,8,16], index: 3, kind: output, shape index: {}]
  %s4 = sld [smem:[#allocation0]]
  $region22: #{tcn_layer.3} parent=0
    _
  %s6 = ssub.s32 1, %s4
  %s7 = scalar_select 0, %s6, %s4
  $region1: #{tcn_layer.3} parent=0
    #allocation2 [shape = 'u8[8192]{0}', space=vmem, size = 0x2000, scoped, tag = 'output window, operand 0, single buffered']
    #allocation3 [shape = 's32[1]{0}', space=sflag, size = 0x4, scoped, tag = 'scoped memory for tcn_layer.3']
    %8 = vsyncpa [#allocation3], 0
    // Predicated region
    $region2: #{tcn_layer.3} parent=1 // pred_check
      _
    $region3: #{tcn_layer.3} parent=1 // pred_check_branch
      %10 = sbr.rel (0) target = $region5
    $region4: #{tcn_layer.3} parent=1 // pred_region
      _
    $region5: #{tcn_layer.3} parent=1 // pred_fallthru
      _
    // Predicated region
    $region6: #{tcn_layer.3} parent=1 // pred_check
      _
    $region7: #{tcn_layer.3} parent=1 // pred_check_branch
      %12 = sbr.rel (0) target = $region9
    $region8: #{tcn_layer.3} parent=1 // pred_region
      _
    $region9: #{tcn_layer.3} parent=1 // pred_fallthru
      _
    // Predicated region
    $region10: #{tcn_layer.3} parent=1 // pred_check
      _
    $region11: #{tcn_layer.3} parent=1 // pred_check_branch
      %14 = sbr.rel (0) target = $region13
    $region12: #{tcn_layer.3} parent=1 // pred_region
      _
    $region13: #{tcn_layer.3} parent=1 // pred_fallthru
      _
    %v15 = vld [vmem:[%s0] sm:$0xf]
    %v16 = vld [vmem:[%s0 + $0x4] sm:$0xf]
    %v17 = vunpack.c.l.bf16 %v15
    %v18 = vunpack.c.l.bf16 %v16
    %v19 = vld [vmem:[%s1] sm:$0xff]
    %21 = vset.pattern.permute.xlu0 0
    %22 = vperm.xlu0 %21, %v19
    %v23 = vpop.permute.xlu0 %22
    %v25 = vmul.f32 %v17, %v23
    %v26 = vmul.f32 %v18, %v23
    %v27 = vld [vmem:[%s2] sm:$0xff]
    %29 = vset.pattern.permute.xlu0 0
    %30 = vperm.xlu0 %29, %v27
    %v31 = vpop.permute.xlu0 %30
    %v33 = vadd.f32 %v25, %v31
    %v34 = vadd.f32 %v26, %v31
    %v35 = vmax.f32 %v33, 0.0
    %v36 = vmax.f32 %v34, 0.0
    %vm37 = vcmask 130048
    %38 = vst.msk [vmem:[#allocation2] sm:$0xff] %vm37, %v35
    %39 = vst.msk [vmem:[#allocation2 + $0x8] sm:$0xff] %vm37, %v36
    // Predicated region
    $region14: #{tcn_layer.3} parent=1 // pred_check
      _
    $region15: #{tcn_layer.3} parent=1 // pred_check_branch
      %41 = sbr.rel (0) target = $region17
    $region16: #{tcn_layer.3} parent=1 // pred_region
      %s43 = ssub.s32 256, 256
      %44 = vsyncadd [#allocation3], %s43
      %s45 = sshll.u32 [#allocation2], 4
      %s46 = int_to_ptr.vmem [resolvable:$true] %s45
      %51 = dma.vmem_to_hbm [thread:$0]  %s46, 256, %s3, [#allocation3], 128, 128, 8
    $region17: #{tcn_layer.3} parent=1 // pred_fallthru
      _
    // Predicated region
    $region18: #{tcn_layer.3} parent=1 // pred_check
      _
    $region19: #{tcn_layer.3} parent=1 // pred_check_branch
      %53 = sbr.rel (0) target = $region21
    $region20: #{tcn_layer.3} parent=1 // pred_region
      %54 = dma.done [#allocation3], 256
    $region21: #{tcn_layer.3} parent=1 // pred_fallthru
      _
    %55 = vsyncpa [#allocation3], 1

</llo_original>
